<compile_context>
chip_gen: v5e
topology: v5e:2x2
jax: 0.10.0
libtpu: 0.0.40
codegen_flags: <defaults>
</compile_context>

<pallas_src>
import math
from functools import partial

import jax
import jax.numpy as jnp
from jax.experimental import pallas as pl
from jax.experimental.pallas import tpu as pltpu


def _round_up(x, m):
    return (x + m - 1) // m * m


def _noq_attn_kernel(k_ref, wk_ref, bk_ref, wc_ref, bc_ref, out_ref,
                     *, tb, lk_pad, lk, h):
    # k_ref : (tb*lk_pad, E)   keys for `tb` batches (flattened batch*seq)
    # wk_ref: (E, H+1)         [Wk | Wk @ qx^T]   (query folded into col H)
    # bk_ref: (1, H+1)         [bk | bk . qx]
    # wc_ref: (H+lk_pad, PW)   [[Wp, 0], [0, I]]  (projection + score pack)
    # bc_ref: (1, PW)          [bp, 0]
    # out_ref: (tb, PW)        packed lane-dense output slab
    kxs = jnp.dot(k_ref[...], wk_ref[...],
                  preferred_element_type=jnp.float32) + bk_ref[...]      # (tb*lk_pad, H+1)
    kxs3 = kxs.reshape(tb, lk_pad, h + 1)                                # free sublane split
    kx3 = kxs3[..., :h]                                                  # (tb, lk_pad, H)
    s3 = kxs3[..., h:]                                                   # (tb, lk_pad, 1)

    if lk_pad != lk:
        # Mask padded (zero) keys out of the softmax.
        key_idx = jax.lax.broadcasted_iota(jnp.int32, (1, lk_pad, 1), 1)
        s3 = jnp.where(key_idx < lk, s3, jnp.float32(-1e30))

    # Numerically-stable softmax over the key (sublane) axis.
    m = jnp.max(s3, axis=1, keepdims=True)
    e = jnp.exp(s3 - m)
    p3 = e * pl.reciprocal(jnp.sum(e, axis=1, keepdims=True), approx=False)  # (tb, lk_pad, 1)

    # Weighted sum of projected keys: VPU multiply + sublane reduce.
    o = jnp.sum(p3 * kx3, axis=1)                                        # (tb, H)

    # Move p to lane layout via an exact one-hot multiply + sublane reduce
    # (same op classes as above; avoids a sublane->lane reshape relayout).
    row = jax.lax.broadcasted_iota(jnp.int32, (1, lk_pad, lk_pad), 1)
    col = jax.lax.broadcasted_iota(jnp.int32, (1, lk_pad, lk_pad), 2)
    onehot = (row == col).astype(jnp.float32)                            # (1, lk_pad, lk_pad)
    p2 = jnp.sum(p3 * onehot, axis=1)                                    # (tb, lk_pad)

    # Fused projection + score passthrough -> one lane-dense (tb, PW) slab.
    x_cat = jnp.concatenate([o, p2], axis=-1)                            # (tb, H+lk_pad)
    packed = jnp.dot(x_cat, wc_ref[...],
                     preferred_element_type=jnp.float32) + bc_ref[...]   # (tb, PW)
    out_ref[...] = packed.astype(out_ref.dtype)


def _auto_batch_tile(B, lk_pad, e, h, pack_w, k_itemsize,
                     target_k_bytes=4 << 20, vmem_budget=24 << 20):
    """Derive the batch tile from byte budgets (kernel is HBM-bound on k)."""
    k_row = lk_pad * e * k_itemsize                    # streamed k bytes / batch row
    # Per-batch-row VMEM working set: double-buffered k block + double-buffered
    # packed output block + ~3x the f32 (lk_pad, H+1) key-projection temp.
    vmem_row = 2 * k_row + 2 * pack_w * 4 + 3 * lk_pad * (h + 1) * 4
    tb = min(target_k_bytes // max(k_row, 1), vmem_budget // max(vmem_row, 1))
    tb = min(tb, _round_up(B, 8))                      # don't pad far past the batch
    if B > 16:
        tb = min(tb, _round_up((B + 1) // 2, 8))       # keep >=2 grid steps (v7x: 2 TCs)
    return max(8, (int(tb) // 8) * 8)


def no_query_attention(k, q_param, wk, bk, wq, bq, wp, bp, *, batch_tile=None):
    """NoQueryAttention forward (defaults: n_head=1, dot_product, q_len=1).

    k: (B, Lk, E); q_param: (1, E); weights (in, out); biases (1, out).
    Returns (output (B, 1, O), score (B, 1, Lk)).
    """
    B, Lk, E = k.shape
    Lq = q_param.shape[0]
    H = wk.shape[1]
    O = wp.shape[1]
    if Lq != 1:
        # TODO(synk): kernel specializes to the module default q_len=1.
        raise NotImplementedError("q_len != 1 not supported by this kernel")
    # TODO(synk): n_head > 1 and 'mlp'/'bi_linear'/'scaled_dot_product' score
    # functions are not implemented (module defaults are n_head=1, dot_product).

    f32 = jnp.float32
    # Hoist the batch-invariant query projection and fold it into Wk/bk:
    #   s = qx . (k @ Wk + bk) = k @ (Wk qx^T) + bk . qx
    qx = jnp.dot(q_param.astype(f32), wq.astype(f32)) + bq.astype(f32)     # (1, H)
    wk_aug = jnp.concatenate(
        [wk.astype(f32), jnp.dot(wk.astype(f32), qx.T)], axis=1)           # (E, H+1)
    bk_aug = jnp.concatenate(
        [bk.astype(f32), jnp.dot(bk.astype(f32), qx.T)], axis=1)           # (1, H+1)
    wk_aug = wk_aug.astype(k.dtype)

    # Pad key length to a sublane multiple so the in-kernel reshape is free.
    Lk_pad = _round_up(Lk, 8)
    if Lk_pad != Lk:
        k = jnp.pad(k, ((0, 0), (0, Lk_pad - Lk), (0, 0)))

    # Packed output columns: [out (O) | score (Lk_pad) | zero pad] -> lane-dense.
    pack_w = _round_up(O + Lk_pad, 128)
    w_cat = jnp.zeros((H + Lk_pad, pack_w), f32)
    w_cat = w_cat.at[:H, :O].set(wp.astype(f32))
    w_cat = w_cat.at[H:, O:O + Lk_pad].set(jnp.eye(Lk_pad, dtype=f32))
    b_cat = jnp.zeros((1, pack_w), f32).at[:, :O].set(bp.astype(f32))

    # Batch tiling.
    if batch_tile is None:
        tb = _auto_batch_tile(B, Lk_pad, E, H, pack_w, k.dtype.itemsize)
    else:
        tb = max(8, _round_up(min(batch_tile, _round_up(B, 8)), 8))
    B_pad = _round_up(B, tb)
    if B_pad != B:
        # Padded batch rows see kx == bk (finite) -> finite softmax; sliced off.
        k = jnp.pad(k, ((0, B_pad - B), (0, 0), (0, 0)))

    # Flatten (B, Lk, E) -> (B*Lk, E) so the kernel streams a dense 2-D slab.
    k2 = k.reshape(B_pad * Lk_pad, E)

    grid = (B_pad // tb,)

    packed = pl.pallas_call(
        partial(_noq_attn_kernel, tb=tb, lk_pad=Lk_pad, lk=Lk, h=H),
        out_shape=jax.ShapeDtypeStruct((B_pad, pack_w), f32),
        grid_spec=pltpu.PrefetchScalarGridSpec(
            num_scalar_prefetch=0,
            grid=grid,
            in_specs=[
                pl.BlockSpec((tb * Lk_pad, E), lambda b: (b, 0)),      # k (streamed)
                pl.BlockSpec((E, H + 1), lambda b: (0, 0)),            # [Wk | Wk qx^T]
                pl.BlockSpec((1, H + 1), lambda b: (0, 0)),            # [bk | bk.qx]
                pl.BlockSpec((H + Lk_pad, pack_w), lambda b: (0, 0)),  # proj + score pack
                pl.BlockSpec((1, pack_w), lambda b: (0, 0)),           # packed bias
            ],
            out_specs=pl.BlockSpec((tb, pack_w), lambda b: (b, 0)),    # lane-dense slab
        ),
        compiler_params=pltpu.CompilerParams(
            dimension_semantics=("parallel",),
            vmem_limit_bytes=48 * 1024 * 1024,
        ),
    )(k2, wk_aug, bk_aug, w_cat, b_cat)

    out = packed[:B, :O].astype(k.dtype).reshape(B, 1, O)
    score = packed[:B, O:O + Lk].reshape(B, 1, Lk)
    return out, score


def _reference(k, q_param, wk, bk, wq, bq, wp, bp):
    B = k.shape[0]
    q = jnp.broadcast_to(q_param[None], (B,) + q_param.shape)
    kx = jnp.einsum("ble,eh->blh", k, wk) + bk
    qx = jnp.einsum("ble,eh->blh", q, wq) + bq
    s = jnp.einsum("bqh,bkh->bqk", qx, kx)
    p = jax.nn.softmax(s, axis=-1)
    o = jnp.einsum("bqk,bkh->bqh", p, kx)
    out = jnp.einsum("bqh,ho->bqo", o, wp) + bp
    return out, p


if __name__ == "__main__":
    # Module hyper-params (defaults of NoQueryAttention):
    embed_dim = 32
    n_head = 1
    hidden_dim = embed_dim // n_head     # 32
    out_dim = embed_dim                  # 32
    q_len = 1
    batch, k_len = 2, 8

    key = jax.random.PRNGKey(0)
    ks = jax.random.split(key, 8)

    # Deterministic parameter init (torch nn.Linear-style uniform bounds).
    lin_bound = 1.0 / math.sqrt(embed_dim)
    wk = jax.random.uniform(ks[0], (embed_dim, n_head * hidden_dim), jnp.float32, -lin_bound, lin_bound)
    bk = jax.random.uniform(ks[1], (1, n_head * hidden_dim), jnp.float32, -lin_bound, lin_bound)
    wq = jax.random.uniform(ks[2], (embed_dim, n_head * hidden_dim), jnp.float32, -lin_bound, lin_bound)
    bq = jax.random.uniform(ks[3], (1, n_head * hidden_dim), jnp.float32, -lin_bound, lin_bound)
    proj_bound = 1.0 / math.sqrt(n_head * hidden_dim)
    wp = jax.random.uniform(ks[4], (n_head * hidden_dim, out_dim), jnp.float32, -proj_bound, proj_bound)
    bp = jax.random.uniform(ks[5], (1, out_dim), jnp.float32, -proj_bound, proj_bound)
    q_bound = 1.0 / math.sqrt(embed_dim)
    q_param = jax.random.uniform(ks[6], (q_len, embed_dim), jnp.float32, -q_bound, q_bound)

    # --- test 1: small batch (auto tile, single grid step, batch padding) ---
    k = jax.random.normal(ks[7], (batch, k_len, embed_dim), jnp.float32)
    out, score = no_query_attention(k, q_param, wk, bk, wq, bq, wp, bp)
    out, score = jax.block_until_ready((out, score))
    ref_out, ref_score = _reference(k, q_param, wk, bk, wq, bq, wp, bp)
    assert out.shape == (batch, q_len, out_dim)
    assert score.shape == (batch, q_len, k_len)
    assert jnp.allclose(out, ref_out, atol=1e-5, rtol=1e-5)
    assert jnp.allclose(score, ref_score, atol=1e-5, rtol=1e-5)

    # --- test 2: explicit small tile -> multi-step grid + batch padding ---
    batch2 = 18
    k2_in = jax.random.normal(jax.random.PRNGKey(1), (batch2, k_len, embed_dim), jnp.float32)
    out2, score2 = no_query_attention(k2_in, q_param, wk, bk, wq, bq, wp, bp, batch_tile=8)
    out2, score2 = jax.block_until_ready((out2, score2))
    ref_out2, ref_score2 = _reference(k2_in, q_param, wk, bk, wq, bq, wp, bp)
    assert out2.shape == (batch2, q_len, out_dim)
    assert score2.shape == (batch2, q_len, k_len)
    assert jnp.allclose(out2, ref_out2, atol=1e-5, rtol=1e-5)
    assert jnp.allclose(score2, ref_score2, atol=1e-5, rtol=1e-5)

    # --- test 3: auto tile, k_len not a multiple of 8 (key padding + mask) ---
    batch3, k_len3 = 40, 10
    k3_in = jax.random.normal(jax.random.PRNGKey(2), (batch3, k_len3, embed_dim), jnp.float32)
    out3, score3 = no_query_attention(k3_in, q_param, wk, bk, wq, bq, wp, bp)
    out3, score3 = jax.block_until_ready((out3, score3))
    ref_out3, ref_score3 = _reference(k3_in, q_param, wk, bk, wq, bq, wp, bp)
    assert out3.shape == (batch3, q_len, out_dim)
    assert score3.shape == (batch3, q_len, k_len3)
    assert jnp.allclose(out3, ref_out3, atol=1e-5, rtol=1e-5)
    assert jnp.allclose(score3, ref_score3, atol=1e-5, rtol=1e-5)

    print("KERNEL_OK")
</pallas_src>

<mosaic_0001>
module attributes {stable_mosaic.version = 11 : i64} {
  func.func @_noq_attn_kernel(%arg0: i32, %arg1: memref<64x32xf32, #tpu.memory_space<vmem>>, %arg2: memref<32x33xf32, #tpu.memory_space<vmem>>, %arg3: memref<1x33xf32, #tpu.memory_space<vmem>>, %arg4: memref<40x128xf32, #tpu.memory_space<vmem>>, %arg5: memref<1x128xf32, #tpu.memory_space<vmem>>, %arg6: memref<8x128xf32, #tpu.memory_space<vmem>>) attributes {dimension_semantics = [#tpu.dimension_semantics<parallel>], iteration_bounds = array<i64: 1>, scalar_prefetch = 0 : i64, scratch_operands = 0 : i64, tpu.core_type = #tpu.core_type<tc>, window_params = [{transform_indices = @transform_0, window_bounds = array<i64: 64, 32>}, {pipeline_mode = #tpu.pipeline_mode<synchronous>, transform_indices = @transform_1, window_bounds = array<i64: 32, 33>}, {pipeline_mode = #tpu.pipeline_mode<synchronous>, transform_indices = @transform_2, window_bounds = array<i64: 1, 33>}, {pipeline_mode = #tpu.pipeline_mode<synchronous>, transform_indices = @transform_3, window_bounds = array<i64: 40, 128>}, {pipeline_mode = #tpu.pipeline_mode<synchronous>, transform_indices = @transform_4, window_bounds = array<i64: 1, 128>}, {transform_indices = @transform_5, window_bounds = array<i64: 8, 128>}]} {
    %c0 = arith.constant 0 : index
    %c0_0 = arith.constant 0 : index
    %0 = vector.load %arg1[%c0, %c0_0] : memref<64x32xf32, #tpu.memory_space<vmem>>, vector<64x32xf32>
    %c0_1 = arith.constant 0 : index
    %c0_2 = arith.constant 0 : index
    %1 = vector.load %arg2[%c0_1, %c0_2] : memref<32x33xf32, #tpu.memory_space<vmem>>, vector<32x33xf32>
    %cst = arith.constant dense<0.000000e+00> : vector<64x33xf32>
    %2 = tpu.matmul %0, %1, %cst {dimension_numbers = #tpu.dot_dimension_numbers<[1], [0], [0], [1], [0, 0, 1, 1], [], []>} : vector<64x32xf32>, vector<32x33xf32>, vector<64x33xf32> -> vector<64x33xf32>
    %c0_3 = arith.constant 0 : index
    %c0_4 = arith.constant 0 : index
    %3 = vector.load %arg3[%c0_3, %c0_4] : memref<1x33xf32, #tpu.memory_space<vmem>>, vector<1x33xf32>
    %4 = vector.broadcast %3 : vector<1x33xf32> to vector<64x33xf32>
    %5 = arith.addf %2, %4 : vector<64x33xf32>
    %6 = vector.shape_cast %5 : vector<64x33xf32> to vector<8x8x33xf32>
    %7 = vector.extract_strided_slice %6 {offsets = [0, 0, 0], sizes = [8, 8, 32], strides = [1, 1, 1]} : vector<8x8x33xf32> to vector<8x8x32xf32>
    %8 = vector.extract_strided_slice %6 {offsets = [0, 0, 32], sizes = [8, 8, 1], strides = [1, 1, 1]} : vector<8x8x33xf32> to vector<8x8x1xf32>
    %cst_5 = arith.constant dense<0xFF800000> : vector<8x1xf32>
    %9 = vector.multi_reduction <maximumf>, %8, %cst_5 [1] : vector<8x8x1xf32> to vector<8x1xf32>
    %10 = vector.shape_cast %9 : vector<8x1xf32> to vector<8x1x1xf32>
    %11 = vector.broadcast %10 : vector<8x1x1xf32> to vector<8x8x1xf32>
    %12 = arith.subf %8, %11 : vector<8x8x1xf32>
    %13 = math.exp %12 : vector<8x8x1xf32>
    %cst_6 = arith.constant dense<0.000000e+00> : vector<8x1xf32>
    %14 = vector.multi_reduction <add>, %13, %cst_6 [1] : vector<8x8x1xf32> to vector<8x1xf32>
    %15 = vector.shape_cast %14 : vector<8x1xf32> to vector<8x1x1xf32>
    %16 = tpu.reciprocal %15 : vector<8x1x1xf32> -> vector<8x1x1xf32>
    %17 = vector.broadcast %16 : vector<8x1x1xf32> to vector<8x8x1xf32>
    %18 = arith.mulf %13, %17 : vector<8x8x1xf32>
    %19 = vector.broadcast %18 : vector<8x8x1xf32> to vector<8x8x32xf32>
    %20 = arith.mulf %19, %7 : vector<8x8x32xf32>
    %cst_7 = arith.constant dense<0.000000e+00> : vector<8x32xf32>
    %21 = vector.multi_reduction <add>, %20, %cst_7 [1] : vector<8x8x32xf32> to vector<8x32xf32>
    %22 = tpu.iota {dimensions = array<i32: 1>} : vector<1x8x8xi32>
    %23 = tpu.iota {dimensions = array<i32: 2>} : vector<1x8x8xi32>
    %24 = arith.cmpi eq, %22, %23 : vector<1x8x8xi32>
    %25 = arith.extui %24 : vector<1x8x8xi1> to vector<1x8x8xi32>
    %26 = arith.sitofp %25 : vector<1x8x8xi32> to vector<1x8x8xf32>
    %27 = vector.broadcast %18 : vector<8x8x1xf32> to vector<8x8x8xf32>
    %28 = vector.broadcast %26 : vector<1x8x8xf32> to vector<8x8x8xf32>
    %29 = arith.mulf %27, %28 : vector<8x8x8xf32>
    %cst_8 = arith.constant dense<0.000000e+00> : vector<8x8xf32>
    %30 = vector.multi_reduction <add>, %29, %cst_8 [1] : vector<8x8x8xf32> to vector<8x8xf32>
    %31 = tpu.concatenate %21, %30 in 1 : vector<8x32xf32>, vector<8x8xf32> -> vector<8x40xf32>
    %c0_9 = arith.constant 0 : index
    %c0_10 = arith.constant 0 : index
    %32 = vector.load %arg4[%c0_9, %c0_10] : memref<40x128xf32, #tpu.memory_space<vmem>>, vector<40x128xf32>
    %cst_11 = arith.constant dense<0.000000e+00> : vector<8x128xf32>
    %33 = tpu.matmul %31, %32, %cst_11 {dimension_numbers = #tpu.dot_dimension_numbers<[1], [0], [0], [1], [0, 0, 1, 1], [], []>} : vector<8x40xf32>, vector<40x128xf32>, vector<8x128xf32> -> vector<8x128xf32>
    %c0_12 = arith.constant 0 : index
    %c0_13 = arith.constant 0 : index
    %34 = vector.load %arg5[%c0_12, %c0_13] : memref<1x128xf32, #tpu.memory_space<vmem>>, vector<1x128xf32>
    %35 = vector.broadcast %34 : vector<1x128xf32> to vector<8x128xf32>
    %36 = arith.addf %33, %35 : vector<8x128xf32>
    %c0_14 = arith.constant 0 : index
    %c0_15 = arith.constant 0 : index
    %37 = vector.load %arg6[%c0_14, %c0_15] : memref<8x128xf32, #tpu.memory_space<vmem>>, vector<8x128xf32>
    tpu.vector_store %arg6[%c0_14, %c0_15], %36 {strides = array<i32>} : memref<8x128xf32, #tpu.memory_space<vmem>>, vector<8x128xf32>,
    return
  }
  func.func @transform_0(%arg0: i32) -> (i32, i32) {
    %c0_i32 = arith.constant 0 : i32
    %c0_i32_0 = arith.constant 0 : i32
    return %arg0, %c0_i32 : i32, i32
  }
  func.func @transform_1(%arg0: i32) -> (i32, i32) {
    %c0_i32 = arith.constant 0 : i32
    %c0_i32_0 = arith.constant 0 : i32
    %c0_i32_1 = arith.constant 0 : i32
    return %c0_i32, %c0_i32_0 : i32, i32
  }
  func.func @transform_2(%arg0: i32) -> (i32, i32) {
    %c0_i32 = arith.constant 0 : i32
    %c0_i32_0 = arith.constant 0 : i32
    %c0_i32_1 = arith.constant 0 : i32
    return %c0_i32, %c0_i32_0 : i32, i32
  }
  func.func @transform_3(%arg0: i32) -> (i32, i32) {
    %c0_i32 = arith.constant 0 : i32
    %c0_i32_0 = arith.constant 0 : i32
    %c0_i32_1 = arith.constant 0 : i32
    return %c0_i32, %c0_i32_0 : i32, i32
  }
  func.func @transform_4(%arg0: i32) -> (i32, i32) {
    %c0_i32 = arith.constant 0 : i32
    %c0_i32_0 = arith.constant 0 : i32
    %c0_i32_1 = arith.constant 0 : i32
    return %c0_i32, %c0_i32_0 : i32, i32
  }
  func.func @transform_5(%arg0: i32) -> (i32, i32) {
    %c0_i32 = arith.constant 0 : i32
    %c0_i32_0 = arith.constant 0 : i32
    return %arg0, %c0_i32 : i32, i32
  }
}

</mosaic_0001>

<llo_original>
// kernel: tpu_custom_call.1
$region0: #{tpu_custom_call.1}
  #allocation0 [shape = 'u32[]', space=smem, size = 0x4, offset = 0x4, fixed_abs, tag = 'smem constant byte address 0x4 - core index']
  #allocation1 [shape = 'u32[72,128]{1,0:T(1,128)}', space=vmem, size = 0x9000, scoped, tag = 'internal scratch']
  %s0 = inlined_call_operand.vmem [shape: f32[64,32], index: 0, kind: input, shape index: {}]
  %s1 = inlined_call_operand.vmem [shape: f32[32,33], index: 1, kind: input, shape index: {}]
  %s2 = inlined_call_operand.vmem [shape: f32[1,33], index: 2, kind: input, shape index: {}]
  %s3 = inlined_call_operand.vmem [shape: f32[40,128], index: 3, kind: input, shape index: {}]
  %s4 = inlined_call_operand.vmem [shape: f32[1,128], index: 4, kind: input, shape index: {}]
  %s5 = inlined_call_operand.hbm [shape: f32[8,128], index: 5, kind: output, shape index: {}]
  %s6 = sld [smem:[#allocation0]]
  $region30: #{tpu_custom_call.1} parent=0
    _
  %s8 = ssub.s32 1, %s6
  %s9 = scalar_select 0, %s8, %s6
  $region1: #{tpu_custom_call.1} parent=0
    #allocation2 [shape = 'u8[4096]{0}', space=vmem, size = 0x1000, scoped, tag = 'output window, operand 0, single buffered']
    #allocation3 [shape = 's32[1]{0}', space=sflag, size = 0x4, scoped, tag = 'scoped memory for tpu_custom_call.1']
    %10 = vsyncpa [#allocation3], 0
    // Predicated region
    $region2: #{tpu_custom_call.1} parent=1 // pred_check
      _
    $region3: #{tpu_custom_call.1} parent=1 // pred_check_branch
      %12 = sbr.rel (0) target = $region5
    $region4: #{tpu_custom_call.1} parent=1 // pred_region
      _
    $region5: #{tpu_custom_call.1} parent=1 // pred_fallthru
      _
    // Predicated region
    $region6: #{tpu_custom_call.1} parent=1 // pred_check
      _
    $region7: #{tpu_custom_call.1} parent=1 // pred_check_branch
      %14 = sbr.rel (0) target = $region9
    $region8: #{tpu_custom_call.1} parent=1 // pred_region
      _
    $region9: #{tpu_custom_call.1} parent=1 // pred_fallthru
      _
    // Predicated region
    $region10: #{tpu_custom_call.1} parent=1 // pred_check
      _
    $region11: #{tpu_custom_call.1} parent=1 // pred_check_branch
      %16 = sbr.rel (0) target = $region13
    $region12: #{tpu_custom_call.1} parent=1 // pred_region
      _
    $region13: #{tpu_custom_call.1} parent=1 // pred_fallthru
      _
    // Predicated region
    $region14: #{tpu_custom_call.1} parent=1 // pred_check
      _
    $region15: #{tpu_custom_call.1} parent=1 // pred_check_branch
      %18 = sbr.rel (0) target = $region17
    $region16: #{tpu_custom_call.1} parent=1 // pred_region
      _
    $region17: #{tpu_custom_call.1} parent=1 // pred_fallthru
      _
    // Predicated region
    $region18: #{tpu_custom_call.1} parent=1 // pred_check
      _
    $region19: #{tpu_custom_call.1} parent=1 // pred_check_branch
      %20 = sbr.rel (0) target = $region21
    $region20: #{tpu_custom_call.1} parent=1 // pred_region
      _
    $region21: #{tpu_custom_call.1} parent=1 // pred_fallthru
      _
    %v21 = vld [vmem:[%s0] sm:$0xff]
    %v22 = vld [vmem:[%s0 + $0x8] sm:$0xff]
    %v23 = vld [vmem:[%s0 + $0x10] sm:$0xff]
    %v24 = vld [vmem:[%s0 + $0x18] sm:$0xff]
    %v25 = vld [vmem:[%s0 + $0x20] sm:$0xff]
    %v26 = vld [vmem:[%s0 + $0x28] sm:$0xff]
    %v27 = vld [vmem:[%s0 + $0x30] sm:$0xff]
    %v28 = vld [vmem:[%s0 + $0x38] sm:$0xff]
    %v29 = vld [vmem:[%s1] sm:$0xff]
    %v30 = vld [vmem:[%s1 + $0x8] sm:$0xff]
    %v31 = vld [vmem:[%s1 + $0x10] sm:$0xff]
    %v32 = vld [vmem:[%s1 + $0x18] sm:$0xff]
    %v33 = vld [vmem:[%s2] sm:$0x1]
    %v35 = vperm.slane %v33, 0
    %vm37 = vcmask 261120
    %v39 = vsel %vm37, %v21, 0
    %v42 = vsel %vm37, %v22, 0
    %v45 = vsel %vm37, %v23, 0
    %v48 = vsel %vm37, %v24, 0
    %v51 = vsel %vm37, %v25, 0
    %v54 = vsel %vm37, %v26, 0
    %v57 = vsel %vm37, %v27, 0
    %v60 = vsel %vm37, %v28, 0
    %62 = vmatpush.msra.mxu0 0.0
    %63 = vmatpush.msra.mxu0 0.0
    %64 = vmatpush.msra.mxu0 0.0
    %65 = vmatpush.msra.mxu0 0.0
    %66 = vmatpush.msra.mxu0 0.0
    %67 = vmatpush.msra.mxu0 0.0
    %68 = vmatpush.msra.mxu0 0.0
    %69 = vmatpush.msra.mxu0 0.0
    %70 = vmatpush.msra.mxu0 0.0
    %71 = vmatpush.msra.mxu0 0.0
    %72 = vmatpush.msra.mxu0 0.0
    %73 = vmatpush.msra.mxu0 0.0
    %74 = vmatpush.msra.mxu0 %v32
    %75 = vmatpush.msra.mxu0 %v31
    %76 = vmatpush.msra.mxu0 %v30
    %77 = vmatpush.msra.mxu0 %v29
    %78 = vmatmul.f32.gmra.mxu0 %v39
    %v79 = vpop.f32.mrf.mxu0
    %v80 = vadd.f32 %v35, %v79
    %81 = vmatmul.f32.gmra.mxu0 %v42
    %v82 = vpop.f32.mrf.mxu0
    %v83 = vadd.f32 %v35, %v82
    %84 = vmatmul.f32.gmra.mxu0 %v45
    %v85 = vpop.f32.mrf.mxu0
    %v86 = vadd.f32 %v35, %v85
    %87 = vmatmul.f32.gmra.mxu0 %v48
    %v88 = vpop.f32.mrf.mxu0
    %v89 = vadd.f32 %v35, %v88
    %90 = vmatmul.f32.gmra.mxu0 %v51
    %v91 = vpop.f32.mrf.mxu0
    %v92 = vadd.f32 %v35, %v91
    %93 = vmatmul.f32.gmra.mxu0 %v54
    %v94 = vpop.f32.mrf.mxu0
    %v95 = vadd.f32 %v35, %v94
    %96 = vmatmul.f32.gmra.mxu0 %v57
    %v97 = vpop.f32.mrf.mxu0
    %v98 = vadd.f32 %v35, %v97
    %99 = vmatmul.f32.gmra.mxu0 %v60
    %v100 = vpop.f32.mrf.mxu0
    %v101 = vadd.f32 %v35, %v100
    %102 = vdwg.mxu0
    %vm103 = vcmask 269568
    %v104 = vsel %vm103, %v80, -inf
    %v105 = vrot.slane %v104, 4
    %v106 = vmax.f32 %v104, %v105
    %v107 = vrot.slane %v106, 2
    %v108 = vmax.f32 %v106, %v107
    %v109 = vrot.slane %v108, 1
    %v110 = vmax.f32 %v108, %v109
    %v111 = vsel %vm103, %v83, -inf
    %v112 = vrot.slane %v111, 4
    %v113 = vmax.f32 %v111, %v112
    %v114 = vrot.slane %v113, 2
    %v115 = vmax.f32 %v113, %v114
    %v116 = vrot.slane %v115, 1
    %v117 = vmax.f32 %v115, %v116
    %v118 = vsel %vm103, %v86, -inf
    %v119 = vrot.slane %v118, 4
    %v120 = vmax.f32 %v118, %v119
    %v121 = vrot.slane %v120, 2
    %v122 = vmax.f32 %v120, %v121
    %v123 = vrot.slane %v122, 1
    %v124 = vmax.f32 %v122, %v123
    %v125 = vsel %vm103, %v89, -inf
    %v126 = vrot.slane %v125, 4
    %v127 = vmax.f32 %v125, %v126
    %v128 = vrot.slane %v127, 2
    %v129 = vmax.f32 %v127, %v128
    %v130 = vrot.slane %v129, 1
    %v131 = vmax.f32 %v129, %v130
    %v132 = vsel %vm103, %v92, -inf
    %v133 = vrot.slane %v132, 4
    %v134 = vmax.f32 %v132, %v133
    %v135 = vrot.slane %v134, 2
    %v136 = vmax.f32 %v134, %v135
    %v137 = vrot.slane %v136, 1
    %v138 = vmax.f32 %v136, %v137
    %v139 = vsel %vm103, %v95, -inf
    %v140 = vrot.slane %v139, 4
    %v141 = vmax.f32 %v139, %v140
    %v142 = vrot.slane %v141, 2
    %v143 = vmax.f32 %v141, %v142
    %v144 = vrot.slane %v143, 1
    %v145 = vmax.f32 %v143, %v144
    %v146 = vsel %vm103, %v98, -inf
    %v147 = vrot.slane %v146, 4
    %v148 = vmax.f32 %v146, %v147
    %v149 = vrot.slane %v148, 2
    %v150 = vmax.f32 %v148, %v149
    %v151 = vrot.slane %v150, 1
    %v152 = vmax.f32 %v150, %v151
    %v153 = vsel %vm103, %v101, -inf
    %v154 = vrot.slane %v153, 4
    %v155 = vmax.f32 %v153, %v154
    %v156 = vrot.slane %v155, 2
    %v157 = vmax.f32 %v155, %v156
    %v158 = vrot.slane %v157, 1
    %v159 = vmax.f32 %v157, %v158
    %v160 = vsub.f32 %v80, %v110
    %v161 = vsub.f32 %v83, %v117
    %v162 = vsub.f32 %v86, %v124
    %v163 = vsub.f32 %v89, %v131
    %v164 = vsub.f32 %v92, %v138
    %v165 = vsub.f32 %v95, %v145
    %v166 = vsub.f32 %v98, %v152
    %v167 = vsub.f32 %v101, %v159
    %v168 = vmul.f32 %v160, 1.442695
    %v169 = vpow.pop %v168
    %v170 = vmul.f32 %v161, 1.442695
    %v171 = vpow.pop %v170
    %v172 = vmul.f32 %v162, 1.442695
    %v173 = vpow.pop %v172
    %v174 = vmul.f32 %v163, 1.442695
    %v175 = vpow.pop %v174
    %v176 = vmul.f32 %v164, 1.442695
    %v177 = vpow.pop %v176
    %v178 = vmul.f32 %v165, 1.442695
    %v179 = vpow.pop %v178
    %v180 = vmul.f32 %v166, 1.442695
    %v181 = vpow.pop %v180
    %v182 = vmul.f32 %v167, 1.442695
    %v183 = vpow.pop %v182
    %v184 = vsel %vm103, %v169, 0.0
    %v185 = vrot.slane %v184, 4
    %v186 = vadd.f32 %v184, %v185
    %v187 = vrot.slane %v186, 2
    %v188 = vadd.f32 %v186, %v187
    %v189 = vrot.slane %v188, 1
    %v190 = vadd.f32 %v188, %v189
    %v191 = vsel %vm103, %v171, 0.0
    %v192 = vrot.slane %v191, 4
    %v193 = vadd.f32 %v191, %v192
    %v194 = vrot.slane %v193, 2
    %v195 = vadd.f32 %v193, %v194
    %v196 = vrot.slane %v195, 1
    %v197 = vadd.f32 %v195, %v196
    %v198 = vsel %vm103, %v173, 0.0
    %v199 = vrot.slane %v198, 4
    %v200 = vadd.f32 %v198, %v199
    %v201 = vrot.slane %v200, 2
    %v202 = vadd.f32 %v200, %v201
    %v203 = vrot.slane %v202, 1
    %v204 = vadd.f32 %v202, %v203
    %v205 = vsel %vm103, %v175, 0.0
    %v206 = vrot.slane %v205, 4
    %v207 = vadd.f32 %v205, %v206
    %v208 = vrot.slane %v207, 2
    %v209 = vadd.f32 %v207, %v208
    %v210 = vrot.slane %v209, 1
    %v211 = vadd.f32 %v209, %v210
    %v212 = vsel %vm103, %v177, 0.0
    %v213 = vrot.slane %v212, 4
    %v214 = vadd.f32 %v212, %v213
    %v215 = vrot.slane %v214, 2
    %v216 = vadd.f32 %v214, %v215
    %v217 = vrot.slane %v216, 1
    %v218 = vadd.f32 %v216, %v217
    %v219 = vsel %vm103, %v179, 0.0
    %v220 = vrot.slane %v219, 4
    %v221 = vadd.f32 %v219, %v220
    %v222 = vrot.slane %v221, 2
    %v223 = vadd.f32 %v221, %v222
    %v224 = vrot.slane %v223, 1
    %v225 = vadd.f32 %v223, %v224
    %v226 = vsel %vm103, %v181, 0.0
    %v227 = vrot.slane %v226, 4
    %v228 = vadd.f32 %v226, %v227
    %v229 = vrot.slane %v228, 2
    %v230 = vadd.f32 %v228, %v229
    %v231 = vrot.slane %v230, 1
    %v232 = vadd.f32 %v230, %v231
    %v233 = vsel %vm103, %v183, 0.0
    %v234 = vrot.slane %v233, 4
    %v235 = vadd.f32 %v233, %v234
    %v236 = vrot.slane %v235, 2
    %v237 = vadd.f32 %v235, %v236
    %v238 = vrot.slane %v237, 1
    %v239 = vadd.f32 %v237, %v238
    %v240 = vrcp.pop %v190
    %v241 = vmul.f32 %v190, %v240
    %v242 = vsub.f32 1.0, %v241
    %v243 = vmul.f32 %v240, %v242
    %v244 = vadd.f32 %v240, %v243
    %vm245 = vweird.f32 %v190
    %vm246 = vweird.f32 %v240
    %vm247 = vmor %vm245, %vm246
    %v248 = vsel %vm247, %v240, %v244
    %v249 = vand.u32 2147483647, %v190
    %vm250 = vcmp.eq.f32.partialorder %v249, 8.507059e+37
    %v251 = vand.u32 %v190, 2147483648
    %v252 = vor.u32 1.1754944e-38, %v251
    %v253 = vsel %vm250, %v252, %v248
    %v254 = vrcp.pop %v197
    %v255 = vmul.f32 %v197, %v254
    %v256 = vsub.f32 1.0, %v255
    %v257 = vmul.f32 %v254, %v256
    %v258 = vadd.f32 %v254, %v257
    %vm259 = vweird.f32 %v197
    %vm260 = vweird.f32 %v254
    %vm261 = vmor %vm259, %vm260
    %v262 = vsel %vm261, %v254, %v258
    %v263 = vand.u32 2147483647, %v197
    %vm264 = vcmp.eq.f32.partialorder %v263, 8.507059e+37
    %v265 = vand.u32 %v197, 2147483648
    %v266 = vor.u32 1.1754944e-38, %v265
    %v267 = vsel %vm264, %v266, %v262
    %v268 = vrcp.pop %v204
    %v269 = vmul.f32 %v204, %v268
    %v270 = vsub.f32 1.0, %v269
    %v271 = vmul.f32 %v268, %v270
    %v272 = vadd.f32 %v268, %v271
    %vm273 = vweird.f32 %v204
    %vm274 = vweird.f32 %v268
    %vm275 = vmor %vm273, %vm274
    %v276 = vsel %vm275, %v268, %v272
    %v277 = vand.u32 2147483647, %v204
    %vm278 = vcmp.eq.f32.partialorder %v277, 8.507059e+37
    %v279 = vand.u32 %v204, 2147483648
    %v280 = vor.u32 1.1754944e-38, %v279
    %v281 = vsel %vm278, %v280, %v276
    %v282 = vrcp.pop %v211
    %v283 = vmul.f32 %v211, %v282
    %v284 = vsub.f32 1.0, %v283
    %v285 = vmul.f32 %v282, %v284
    %v286 = vadd.f32 %v282, %v285
    %vm287 = vweird.f32 %v211
    %vm288 = vweird.f32 %v282
    %vm289 = vmor %vm287, %vm288
    %v290 = vsel %vm289, %v282, %v286
    %v291 = vand.u32 2147483647, %v211
    %vm292 = vcmp.eq.f32.partialorder %v291, 8.507059e+37
    %v293 = vand.u32 %v211, 2147483648
    %v294 = vor.u32 1.1754944e-38, %v293
    %v295 = vsel %vm292, %v294, %v290
    %v296 = vrcp.pop %v218
    %v297 = vmul.f32 %v218, %v296
    %v298 = vsub.f32 1.0, %v297
    %v299 = vmul.f32 %v296, %v298
    %v300 = vadd.f32 %v296, %v299
    %vm301 = vweird.f32 %v218
    %vm302 = vweird.f32 %v296
    %vm303 = vmor %vm301, %vm302
    %v304 = vsel %vm303, %v296, %v300
    %v305 = vand.u32 2147483647, %v218
    %vm306 = vcmp.eq.f32.partialorder %v305, 8.507059e+37
    %v307 = vand.u32 %v218, 2147483648
    %v308 = vor.u32 1.1754944e-38, %v307
    %v309 = vsel %vm306, %v308, %v304
    %v310 = vrcp.pop %v225
    %v311 = vmul.f32 %v225, %v310
    %v312 = vsub.f32 1.0, %v311
    %v313 = vmul.f32 %v310, %v312
    %v314 = vadd.f32 %v310, %v313
    %vm315 = vweird.f32 %v225
    %vm316 = vweird.f32 %v310
    %vm317 = vmor %vm315, %vm316
    %v318 = vsel %vm317, %v310, %v314
    %v319 = vand.u32 2147483647, %v225
    %vm320 = vcmp.eq.f32.partialorder %v319, 8.507059e+37
    %v321 = vand.u32 %v225, 2147483648
    %v322 = vor.u32 1.1754944e-38, %v321
    %v323 = vsel %vm320, %v322, %v318
    %v324 = vrcp.pop %v232
    %v325 = vmul.f32 %v232, %v324
    %v326 = vsub.f32 1.0, %v325
    %v327 = vmul.f32 %v324, %v326
    %v328 = vadd.f32 %v324, %v327
    %vm329 = vweird.f32 %v232
    %vm330 = vweird.f32 %v324
    %vm331 = vmor %vm329, %vm330
    %v332 = vsel %vm331, %v324, %v328
    %v333 = vand.u32 2147483647, %v232
    %vm334 = vcmp.eq.f32.partialorder %v333, 8.507059e+37
    %v335 = vand.u32 %v232, 2147483648
    %v336 = vor.u32 1.1754944e-38, %v335
    %v337 = vsel %vm334, %v336, %v332
    %v338 = vrcp.pop %v239
    %v339 = vmul.f32 %v239, %v338
    %v340 = vsub.f32 1.0, %v339
    %v341 = vmul.f32 %v338, %v340
    %v342 = vadd.f32 %v338, %v341
    %vm343 = vweird.f32 %v239
    %vm344 = vweird.f32 %v338
    %vm345 = vmor %vm343, %vm344
    %v346 = vsel %vm345, %v338, %v342
    %v347 = vand.u32 2147483647, %v239
    %vm348 = vcmp.eq.f32.partialorder %v347, 8.507059e+37
    %v349 = vand.u32 %v239, 2147483648
    %v350 = vor.u32 1.1754944e-38, %v349
    %v351 = vsel %vm348, %v350, %v346
    %v352 = vmul.f32 %v169, %v253
    %v353 = vmul.f32 %v171, %v267
    %v354 = vmul.f32 %v173, %v281
    %v355 = vmul.f32 %v175, %v295
    %v356 = vmul.f32 %v177, %v309
    %v357 = vmul.f32 %v179, %v323
    %v358 = vmul.f32 %v181, %v337
    %v359 = vmul.f32 %v183, %v351
    %361 = vset.pattern.permute.xlu0 32
    %362 = vperm.xlu0 %361, %v352
    %v363 = vpop.permute.xlu0 %362
    %366 = vset.pattern.permute.xlu0 32
    %367 = vperm.xlu0 %366, %v353
    %v368 = vpop.permute.xlu0 %367
    %371 = vset.pattern.permute.xlu0 32
    %372 = vperm.xlu0 %371, %v354
    %v373 = vpop.permute.xlu0 %372
    %376 = vset.pattern.permute.xlu0 32
    %377 = vperm.xlu0 %376, %v355
    %v378 = vpop.permute.xlu0 %377
    %381 = vset.pattern.permute.xlu0 32
    %382 = vperm.xlu0 %381, %v356
    %v383 = vpop.permute.xlu0 %382
    %386 = vset.pattern.permute.xlu0 32
    %387 = vperm.xlu0 %386, %v357
    %v388 = vpop.permute.xlu0 %387
    %391 = vset.pattern.permute.xlu0 32
    %392 = vperm.xlu0 %391, %v358
    %v393 = vpop.permute.xlu0 %392
    %396 = vset.pattern.permute.xlu0 32
    %397 = vperm.xlu0 %396, %v359
    %v398 = vpop.permute.xlu0 %397
    %v400 = vmul.f32 %v363, %v80
    %v401 = vmul.f32 %v368, %v83
    %v402 = vmul.f32 %v373, %v86
    %v403 = vmul.f32 %v378, %v89
    %v404 = vmul.f32 %v383, %v92
    %v405 = vmul.f32 %v388, %v95
    %v406 = vmul.f32 %v393, %v98
    %v407 = vmul.f32 %v398, %v101
    %v408 = vsel %vm37, %v400, 0.0
    %v409 = vrot.slane %v408, 4
    %v410 = vadd.f32 %v408, %v409
    %v411 = vrot.slane %v410, 2
    %v412 = vadd.f32 %v410, %v411
    %v413 = vrot.slane %v412, 1
    %v414 = vadd.f32 %v412, %v413
    %v415 = vsel %vm37, %v401, 0.0
    %v416 = vrot.slane %v415, 4
    %v417 = vadd.f32 %v415, %v416
    %v418 = vrot.slane %v417, 2
    %v419 = vadd.f32 %v417, %v418
    %v420 = vrot.slane %v419, 1
    %v421 = vadd.f32 %v419, %v420
    %v422 = vsel %vm37, %v402, 0.0
    %v423 = vrot.slane %v422, 4
    %v424 = vadd.f32 %v422, %v423
    %v425 = vrot.slane %v424, 2
    %v426 = vadd.f32 %v424, %v425
    %v427 = vrot.slane %v426, 1
    %v428 = vadd.f32 %v426, %v427
    %v429 = vsel %vm37, %v403, 0.0
    %v430 = vrot.slane %v429, 4
    %v431 = vadd.f32 %v429, %v430
    %v432 = vrot.slane %v431, 2
    %v433 = vadd.f32 %v431, %v432
    %v434 = vrot.slane %v433, 1
    %v435 = vadd.f32 %v433, %v434
    %v436 = vsel %vm37, %v404, 0.0
    %v437 = vrot.slane %v436, 4
    %v438 = vadd.f32 %v436, %v437
    %v439 = vrot.slane %v438, 2
    %v440 = vadd.f32 %v438, %v439
    %v441 = vrot.slane %v440, 1
    %v442 = vadd.f32 %v440, %v441
    %v443 = vsel %vm37, %v405, 0.0
    %v444 = vrot.slane %v443, 4
    %v445 = vadd.f32 %v443, %v444
    %v446 = vrot.slane %v445, 2
    %v447 = vadd.f32 %v445, %v446
    %v448 = vrot.slane %v447, 1
    %v449 = vadd.f32 %v447, %v448
    %v450 = vsel %vm37, %v406, 0.0
    %v451 = vrot.slane %v450, 4
    %v452 = vadd.f32 %v450, %v451
    %v453 = vrot.slane %v452, 2
    %v454 = vadd.f32 %v452, %v453
    %v455 = vrot.slane %v454, 1
    %v456 = vadd.f32 %v454, %v455
    %v457 = vsel %vm37, %v407, 0.0
    %v458 = vrot.slane %v457, 4
    %v459 = vadd.f32 %v457, %v458
    %v460 = vrot.slane %v459, 2
    %v461 = vadd.f32 %v459, %v460
    %v462 = vrot.slane %v461, 1
    %v463 = vadd.f32 %v461, %v462
    %v464 = vlaneseq
    %v465 = vshrl.u32 %v464, 7
    %v466 = vlaneseq
    %v467 = vand.u32 %v466, 127
    %vm468 = vcmp.eq.s32.totalorder %v465, %v467
    %v469 = vsel %vm468, 1, 0
    %v470 = vcvt.s32.f32 %v469
    %v471 = vmul.f32 %v363, %v470
    %v472 = vmul.f32 %v368, %v470
    %v473 = vmul.f32 %v373, %v470
    %v474 = vmul.f32 %v378, %v470
    %v475 = vmul.f32 %v383, %v470
    %v476 = vmul.f32 %v388, %v470
    %v477 = vmul.f32 %v393, %v470
    %v478 = vmul.f32 %v398, %v470
    %vm479 = vcmask 64512
    %v480 = vsel %vm479, %v471, 0.0
    %v481 = vrot.slane %v480, 4
    %v482 = vadd.f32 %v480, %v481
    %v483 = vrot.slane %v482, 2
    %v484 = vadd.f32 %v482, %v483
    %v485 = vrot.slane %v484, 1
    %v486 = vadd.f32 %v484, %v485
    %v487 = vsel %vm479, %v472, 0.0
    %v488 = vrot.slane %v487, 4
    %v489 = vadd.f32 %v487, %v488
    %v490 = vrot.slane %v489, 2
    %v491 = vadd.f32 %v489, %v490
    %v492 = vrot.slane %v491, 1
    %v493 = vadd.f32 %v491, %v492
    %v494 = vsel %vm479, %v473, 0.0
    %v495 = vrot.slane %v494, 4
    %v496 = vadd.f32 %v494, %v495
    %v497 = vrot.slane %v496, 2
    %v498 = vadd.f32 %v496, %v497
    %v499 = vrot.slane %v498, 1
    %v500 = vadd.f32 %v498, %v499
    %v501 = vsel %vm479, %v474, 0.0
    %v502 = vrot.slane %v501, 4
    %v503 = vadd.f32 %v501, %v502
    %v504 = vrot.slane %v503, 2
    %v505 = vadd.f32 %v503, %v504
    %v506 = vrot.slane %v505, 1
    %v507 = vadd.f32 %v505, %v506
    %v508 = vsel %vm479, %v475, 0.0
    %v509 = vrot.slane %v508, 4
    %v510 = vadd.f32 %v508, %v509
    %v511 = vrot.slane %v510, 2
    %v512 = vadd.f32 %v510, %v511
    %v513 = vrot.slane %v512, 1
    %v514 = vadd.f32 %v512, %v513
    %v515 = vsel %vm479, %v476, 0.0
    %v516 = vrot.slane %v515, 4
    %v517 = vadd.f32 %v515, %v516
    %v518 = vrot.slane %v517, 2
    %v519 = vadd.f32 %v517, %v518
    %v520 = vrot.slane %v519, 1
    %v521 = vadd.f32 %v519, %v520
    %v522 = vsel %vm479, %v477, 0.0
    %v523 = vrot.slane %v522, 4
    %v524 = vadd.f32 %v522, %v523
    %v525 = vrot.slane %v524, 2
    %v526 = vadd.f32 %v524, %v525
    %v527 = vrot.slane %v526, 1
    %v528 = vadd.f32 %v526, %v527
    %v529 = vsel %vm479, %v478, 0.0
    %v530 = vrot.slane %v529, 4
    %v531 = vadd.f32 %v529, %v530
    %v532 = vrot.slane %v531, 2
    %v533 = vadd.f32 %v531, %v532
    %v534 = vrot.slane %v533, 1
    %v535 = vadd.f32 %v533, %v534
    %vm544 = vcmask 1041409
    %v545 = vsel %vm544, %v421, %v414
    %vm546 = vcmask 1042434
    %v547 = vsel %vm546, %v428, %v545
    %vm548 = vcmask 1043459
    %v549 = vsel %vm548, %v435, %v547
    %vm550 = vcmask 1044484
    %v551 = vsel %vm550, %v442, %v549
    %vm552 = vcmask 1045509
    %v553 = vsel %vm552, %v449, %v551
    %vm554 = vcmask 1046534
    %v555 = vsel %vm554, %v456, %v553
    %vm556 = vcmask 1047559
    %v557 = vsel %vm556, %v463, %v555
    %v567 = vsel %vm544, %v493, %v486
    %v568 = vsel %vm546, %v500, %v567
    %v569 = vsel %vm548, %v507, %v568
    %v570 = vsel %vm550, %v514, %v569
    %v571 = vsel %vm552, %v521, %v570
    %v572 = vsel %vm554, %v528, %v571
    %v573 = vsel %vm556, %v535, %v572
    %574 = vrot.lane.b32.xlu0 %v573, 32
    %v575 = vpop.permute.xlu0 %574
    %v577 = vsel %vm37, %v557, %v575
    %v578 = vld [vmem:[%s3] sm:$0xff]
    %v579 = vld [vmem:[%s3 + $0x8] sm:$0xff]
    %v580 = vld [vmem:[%s3 + $0x10] sm:$0xff]
    %v581 = vld [vmem:[%s3 + $0x18] sm:$0xff]
    %v582 = vld [vmem:[%s3 + $0x20] sm:$0xff]
    %v583 = vld [vmem:[%s4] sm:$0x1]
    %v585 = vperm.slane %v583, 0
    %vm587 = vcmask 326656
    %v589 = vsel %vm587, %v577, 0
    %591 = vmatpush.msra.mxu0 0.0
    %592 = vmatpush.msra.mxu0 0.0
    %593 = vmatpush.msra.mxu0 0.0
    %594 = vmatpush.msra.mxu0 0.0
    %595 = vmatpush.msra.mxu0 0.0
    %596 = vmatpush.msra.mxu0 0.0
    %597 = vmatpush.msra.mxu0 0.0
    %598 = vmatpush.msra.mxu0 0.0
    %599 = vmatpush.msra.mxu0 0.0
    %600 = vmatpush.msra.mxu0 0.0
    %601 = vmatpush.msra.mxu0 0.0
    %602 = vmatpush.msra.mxu0 %v582
    %603 = vmatpush.msra.mxu0 %v581
    %604 = vmatpush.msra.mxu0 %v580
    %605 = vmatpush.msra.mxu0 %v579
    %606 = vmatpush.msra.mxu0 %v578
    %607 = vmatmul.f32.gmra.mxu0 %v589
    %v608 = vpop.f32.mrf.mxu0
    %v609 = vadd.f32 %v585, %v608
    %610 = vdwg.mxu0
    %611 = vst [vmem:[#allocation2] sm:$0xff] %v609
    // Predicated region
    $region22: #{tpu_custom_call.1} parent=1 // pred_check
      _
    $region23: #{tpu_custom_call.1} parent=1 // pred_check_branch
      %613 = sbr.rel (0) target = $region25
    $region24: #{tpu_custom_call.1} parent=1 // pred_region
      %615 = vsyncadd [#allocation3], 0
      %s617 = sshll.u32 [#allocation2], 4
      %s618 = int_to_ptr.vmem [resolvable:$true] %s617
      %s619 = sshll.u32 %s5, 4
      %s620 = int_to_ptr.hbm [resolvable:$true] %s619
      %622 = dma.vmem_to_hbm [thread:$0]  %s618, 128, %s620, [#allocation3]
    $region25: #{tpu_custom_call.1} parent=1 // pred_fallthru
      _
    // Predicated region
    $region26: #{tpu_custom_call.1} parent=1 // pred_check
      _
    $region27: #{tpu_custom_call.1} parent=1 // pred_check_branch
      %624 = sbr.rel (0) target = $region29
    $region28: #{tpu_custom_call.1} parent=1 // pred_region
      %626 = dma.done [#allocation3], 128
    $region29: #{tpu_custom_call.1} parent=1 // pred_fallthru
      _
    %627 = vsyncpa [#allocation3], 1

</llo_original>
